<compile_context>
chip_gen: v5e
topology: v5e:2x2
jax: 0.10.0
libtpu: 0.0.40
codegen_flags: <defaults>
</compile_context>

<pallas_src>
import jax
import jax.numpy as jnp
from jax.experimental import pallas as pl
from jax.experimental.pallas import tpu as pltpu

D_BASE = 10000.0


def _pe_add_kernel(x_ref, pe_ref, o_ref):
    # x_ref / o_ref: (B_TILE, S_TILE, H) VMEM tiles; pe_ref: (S_TILE, H).
    o_ref[...] = x_ref[...] + pe_ref[...][None, :, :].astype(o_ref.dtype)


def _pe_table(seq_len, hidden_dim, dtype=jnp.float32):
    # Identical to the PyTorch PE() construction (sin in even cols, cos in odd).
    i = jnp.arange(seq_len, dtype=jnp.float32)[:, None]                 # (S, 1)
    k = jnp.arange(hidden_dim // 2, dtype=jnp.float32)[None, :]         # (1, H/2)
    inv_freq = jnp.float32(D_BASE) ** (-(2.0 * k / jnp.float32(hidden_dim)))
    angle = i * inv_freq                                                # (S, H/2)
    pe = jnp.zeros((seq_len, hidden_dim), jnp.float32)
    pe = pe.at[:, 0::2].set(jnp.sin(angle))
    pe = pe.at[:, 1::2].set(jnp.cos(angle))
    return pe.astype(dtype)


def _pick_tile(dim, target, align):
    """Largest multiple of `align` that divides `dim` and is <= target,
    falling back to the full dim (always a legal block size)."""
    if dim <= target:
        return dim
    t = (min(target, dim) // align) * align
    while t >= align:
        if dim % t == 0:
            return t
        t -= align
    return dim


def positional_encoding_add(x):
    """x: (n, seq_len, hidden_dim). Returns x + PE[:seq_len] (broadcast over n)."""
    n, s, h = x.shape
    pe = _pe_table(s, h, x.dtype)

    # Seq tile: multiple of 8 (sublane) up to 1024 rows; batch tile sized so a
    # block is ~2 MiB for f32 / H=128 (B_TILE * S_TILE ~ 4096 rows).
    s_tile = _pick_tile(s, 1024, 8)
    b_tile = _pick_tile(n, max(1, 4096 // s_tile), 1)
    grid = (pl.cdiv(s, s_tile), pl.cdiv(n, b_tile))  # batch axis fastest

    return pl.pallas_call(
        _pe_add_kernel,
        out_shape=jax.ShapeDtypeStruct((n, s, h), x.dtype),
        grid_spec=pltpu.PrefetchScalarGridSpec(
            num_scalar_prefetch=0,
            grid=grid,
            in_specs=[
                pl.BlockSpec((b_tile, s_tile, h), lambda si, bi: (bi, si, 0)),
                # PE block ignores the (fast) batch axis -> not re-DMA'd while
                # bi varies at fixed si.
                pl.BlockSpec((s_tile, h), lambda si, bi: (si, 0)),
            ],
            out_specs=pl.BlockSpec((b_tile, s_tile, h), lambda si, bi: (bi, si, 0)),
        ),
        compiler_params=pltpu.CompilerParams(
            dimension_semantics=("parallel", "parallel"),
        ),
    )(x, pe)


if __name__ == "__main__":
    batch, seq_len, hidden_dim = 2, 32, 128   # module: max_seq_length=32, hidden_dim=128
    key = jax.random.PRNGKey(0)
    x = jax.random.normal(key, (batch, seq_len, hidden_dim), dtype=jnp.float32)

    out = positional_encoding_add(x)
    out = jax.block_until_ready(out)

    ref = x + _pe_table(seq_len, hidden_dim)[None, :, :]
    assert out.shape == (batch, seq_len, hidden_dim)
    assert jnp.allclose(out, ref, atol=1e-5, rtol=1e-5), "mismatch vs reference"
    print("KERNEL_OK")
</pallas_src>

<mosaic_0001>
module attributes {stable_mosaic.version = 11 : i64} {
  func.func @_pe_add_kernel(%arg0: i32, %arg1: i32, %arg2: memref<2x32x128xf32, #tpu.memory_space<vmem>>, %arg3: memref<32x128xf32, #tpu.memory_space<vmem>>, %arg4: memref<2x32x128xf32, #tpu.memory_space<vmem>>) attributes {dimension_semantics = [#tpu.dimension_semantics<parallel>, #tpu.dimension_semantics<parallel>], iteration_bounds = array<i64: 1, 1>, scalar_prefetch = 0 : i64, scratch_operands = 0 : i64, tpu.core_type = #tpu.core_type<tc>, window_params = [{transform_indices = @transform_0, window_bounds = array<i64: 2, 32, 128>}, {transform_indices = @transform_1, window_bounds = array<i64: 32, 128>}, {transform_indices = @transform_2, window_bounds = array<i64: 2, 32, 128>}]} {
    %c0 = arith.constant 0 : index
    %c0_0 = arith.constant 0 : index
    %c0_1 = arith.constant 0 : index
    %0 = vector.load %arg2[%c0, %c0_0, %c0_1] : memref<2x32x128xf32, #tpu.memory_space<vmem>>, vector<2x32x128xf32>
    %c0_2 = arith.constant 0 : index
    %c0_3 = arith.constant 0 : index
    %1 = vector.load %arg3[%c0_2, %c0_3] : memref<32x128xf32, #tpu.memory_space<vmem>>, vector<32x128xf32>
    %2 = vector.shape_cast %1 : vector<32x128xf32> to vector<1x32x128xf32>
    %3 = vector.broadcast %2 : vector<1x32x128xf32> to vector<2x32x128xf32>
    %4 = arith.addf %0, %3 : vector<2x32x128xf32>
    %c0_4 = arith.constant 0 : index
    %c0_5 = arith.constant 0 : index
    %c0_6 = arith.constant 0 : index
    %5 = vector.load %arg4[%c0_4, %c0_5, %c0_6] : memref<2x32x128xf32, #tpu.memory_space<vmem>>, vector<2x32x128xf32>
    tpu.vector_store %arg4[%c0_4, %c0_5, %c0_6], %4 {strides = array<i32>} : memref<2x32x128xf32, #tpu.memory_space<vmem>>, vector<2x32x128xf32>,
    return
  }
  func.func @transform_0(%arg0: i32, %arg1: i32) -> (i32, i32, i32) {
    %c0_i32 = arith.constant 0 : i32
    %c0_i32_0 = arith.constant 0 : i32
    return %arg1, %arg0, %c0_i32 : i32, i32, i32
  }
  func.func @transform_1(%arg0: i32, %arg1: i32) -> (i32, i32) {
    %c0_i32 = arith.constant 0 : i32
    %c0_i32_0 = arith.constant 0 : i32
    return %arg0, %c0_i32 : i32, i32
  }
  func.func @transform_2(%arg0: i32, %arg1: i32) -> (i32, i32, i32) {
    %c0_i32 = arith.constant 0 : i32
    %c0_i32_0 = arith.constant 0 : i32
    return %arg1, %arg0, %c0_i32 : i32, i32, i32
  }
}

</mosaic_0001>

<llo_original>
// kernel: tpu_custom_call.1
$region0: #{tpu_custom_call.1}
  #allocation0 [shape = 'u32[]', space=smem, size = 0x4, offset = 0x4, fixed_abs, tag = 'smem constant byte address 0x4 - core index']
  #allocation1 [shape = 'u32[72,128]{1,0:T(1,128)}', space=vmem, size = 0x9000, scoped, tag = 'internal scratch']
  %s0 = inlined_call_operand.hbm [shape: f32[2,32,128], index: 0, kind: input, shape index: {}]
  %s1 = inlined_call_operand.hbm [shape: f32[32,128], index: 1, kind: input, shape index: {}]
  %s2 = inlined_call_operand.hbm [shape: f32[2,32,128], index: 2, kind: output, shape index: {}]
  %s3 = sld [smem:[#allocation0]]
  $region26: #{tpu_custom_call.1} parent=0
    _
  %s5 = ssub.s32 1, %s3
  %s6 = scalar_select 0, %s5, %s3
  $region1: #{tpu_custom_call.1} parent=0
    #allocation2 [shape = 'u8[32768]{0}', space=vmem, size = 0x8000, scoped, tag = 'input window, operand 0, single buffered']
    #allocation3 [shape = 's32[1]{0}', space=sflag, size = 0x4, scoped, tag = 'scoped memory for tpu_custom_call.1']
    #allocation4 [shape = 's32[1]{0}', space=sflag, size = 0x4, scoped, tag = 'scoped memory for tpu_custom_call.1']
    #allocation5 [shape = 'u8[16384]{0}', space=vmem, size = 0x4000, scoped, tag = 'input window, operand 1, single buffered']
    #allocation6 [shape = 's32[1]{0}', space=sflag, size = 0x4, scoped, tag = 'scoped memory for tpu_custom_call.1']
    #allocation7 [shape = 'u8[32768]{0}', space=vmem, size = 0x8000, scoped, tag = 'output window, operand 0, single buffered']
    %7 = vsyncpa [#allocation3], 0
    %8 = vsyncpa [#allocation6], 0
    %9 = vsyncpa [#allocation4], 0
    // Predicated region
    $region2: #{tpu_custom_call.1} parent=1 // pred_check
      _
    $region3: #{tpu_custom_call.1} parent=1 // pred_check_branch
      %11 = sbr.rel (0) target = $region5
    $region4: #{tpu_custom_call.1} parent=1 // pred_region
      %13 = vsyncadd [#allocation3], 0
      %s14 = sshll.u32 %s0, 4
      %s15 = int_to_ptr.hbm [resolvable:$true] %s14
      %s16 = sshll.u32 [#allocation2], 4
      %s17 = int_to_ptr.vmem [resolvable:$true] %s16
      %22 = dma.hbm_to_vmem [thread:$0]  %s15, 1024, %s17, [#allocation3], 128, 128, 8
    $region5: #{tpu_custom_call.1} parent=1 // pred_fallthru
      _
    // Predicated region
    $region6: #{tpu_custom_call.1} parent=1 // pred_check
      _
    $region7: #{tpu_custom_call.1} parent=1 // pred_check_branch
      %24 = sbr.rel (0) target = $region9
    $region8: #{tpu_custom_call.1} parent=1 // pred_region
      %26 = vsyncadd [#allocation6], 0
      %s27 = sshll.u32 %s1, 4
      %s28 = int_to_ptr.hbm [resolvable:$true] %s27
      %s29 = sshll.u32 [#allocation5], 4
      %s30 = int_to_ptr.vmem [resolvable:$true] %s29
      %35 = dma.hbm_to_vmem [thread:$0]  %s28, 512, %s30, [#allocation6], 128, 128, 8
    $region9: #{tpu_custom_call.1} parent=1 // pred_fallthru
      _
    // Predicated region
    $region10: #{tpu_custom_call.1} parent=1 // pred_check
      _
    $region11: #{tpu_custom_call.1} parent=1 // pred_check_branch
      %37 = sbr.rel (0) target = $region13
    $region12: #{tpu_custom_call.1} parent=1 // pred_region
      %39 = dma.done [#allocation3], 1024
    $region13: #{tpu_custom_call.1} parent=1 // pred_fallthru
      _
    // Predicated region
    $region14: #{tpu_custom_call.1} parent=1 // pred_check
      _
    $region15: #{tpu_custom_call.1} parent=1 // pred_check_branch
      %41 = sbr.rel (0) target = $region17
    $region16: #{tpu_custom_call.1} parent=1 // pred_region
      %43 = dma.done [#allocation6], 512
    $region17: #{tpu_custom_call.1} parent=1 // pred_fallthru
      _
    %v44 = vld [vmem:[#allocation2] sm:$0xff]
    %v45 = vld [vmem:[#allocation2 + $0x8] sm:$0xff]
    %v46 = vld [vmem:[#allocation2 + $0x10] sm:$0xff]
    %v47 = vld [vmem:[#allocation2 + $0x18] sm:$0xff]
    %v48 = vld [vmem:[#allocation2 + $0x20] sm:$0xff]
    %v49 = vld [vmem:[#allocation2 + $0x28] sm:$0xff]
    %v50 = vld [vmem:[#allocation2 + $0x30] sm:$0xff]
    %v51 = vld [vmem:[#allocation2 + $0x38] sm:$0xff]
    %v52 = vld [vmem:[#allocation5] sm:$0xff]
    %v53 = vld [vmem:[#allocation5 + $0x8] sm:$0xff]
    %v54 = vld [vmem:[#allocation5 + $0x10] sm:$0xff]
    %v55 = vld [vmem:[#allocation5 + $0x18] sm:$0xff]
    %v56 = vadd.f32 %v44, %v52
    %v57 = vadd.f32 %v45, %v53
    %v58 = vadd.f32 %v46, %v54
    %v59 = vadd.f32 %v47, %v55
    %v60 = vadd.f32 %v48, %v52
    %v61 = vadd.f32 %v49, %v53
    %v62 = vadd.f32 %v50, %v54
    %v63 = vadd.f32 %v51, %v55
    %64 = vst [vmem:[#allocation7] sm:$0xff] %v56
    %65 = vst [vmem:[#allocation7 + $0x8] sm:$0xff] %v57
    %66 = vst [vmem:[#allocation7 + $0x10] sm:$0xff] %v58
    %67 = vst [vmem:[#allocation7 + $0x18] sm:$0xff] %v59
    %68 = vst [vmem:[#allocation7 + $0x20] sm:$0xff] %v60
    %69 = vst [vmem:[#allocation7 + $0x28] sm:$0xff] %v61
    %70 = vst [vmem:[#allocation7 + $0x30] sm:$0xff] %v62
    %71 = vst [vmem:[#allocation7 + $0x38] sm:$0xff] %v63
    // Predicated region
    $region18: #{tpu_custom_call.1} parent=1 // pred_check
      _
    $region19: #{tpu_custom_call.1} parent=1 // pred_check_branch
      %73 = sbr.rel (0) target = $region21
    $region20: #{tpu_custom_call.1} parent=1 // pred_region
      %75 = vsyncadd [#allocation4], 0
      %s76 = sshll.u32 [#allocation7], 4
      %s77 = int_to_ptr.vmem [resolvable:$true] %s76
      %s78 = sshll.u32 %s2, 4
      %s79 = int_to_ptr.hbm [resolvable:$true] %s78
      %84 = dma.vmem_to_hbm [thread:$0]  %s77, 1024, %s79, [#allocation4], 128, 128, 8
    $region21: #{tpu_custom_call.1} parent=1 // pred_fallthru
      _
    // Predicated region
    $region22: #{tpu_custom_call.1} parent=1 // pred_check
      _
    $region23: #{tpu_custom_call.1} parent=1 // pred_check_branch
      %86 = sbr.rel (0) target = $region25
    $region24: #{tpu_custom_call.1} parent=1 // pred_region
      %88 = dma.done [#allocation4], 1024
    $region25: #{tpu_custom_call.1} parent=1 // pred_fallthru
      _
    %89 = vsyncpa [#allocation3], 1
    %90 = vsyncpa [#allocation6], 1
    %91 = vsyncpa [#allocation4], 1

</llo_original>
